<compile_context>
chip_gen: v5e
topology: v5e:2x2
jax: 0.10.0
libtpu: 0.0.40
codegen_flags: <defaults>
</compile_context>

<pallas_src>
import functools

import jax
import jax.numpy as jnp
from jax.experimental import pallas as pl
from jax.experimental.pallas import tpu as pltpu

EPS = 1e-5  # PyTorch BatchNorm default eps (eval mode: running stats)


# ---------------------------------------------------------------------------
# Fused kernel: whole forward pass in one invocation, everything in VMEM.
# ---------------------------------------------------------------------------
def fused_forward_kernel(
    x_ref,                      # (B*S_in, D_in)   flattened input tokens
    inp_w_ref, inp_b_ref,       # (D_in, E), (1, E)
    cls_ref,                    # (1, E)
    bn0_s_ref, bn0_h_ref,       # (L, 1, E)   folded BN scale/shift (linear_0)
    w2_ref,                     # (L, E, 2E)  linear_2 weights
    bn3_s_ref, bn3_h_ref,       # (L, 1, 2E)  folded BN scale/shift (linear_3)
    w5_ref,                     # (L, 2E, E)  linear_5 weights
    hbn_s_ref, hbn_h_ref,       # (1, E)      folded out_layer_0 BN
    out_w_ref, out_b_ref,       # (E, NC), (1, NC)
    o_ref,                      # (B, NC) output: log-probabilities
    act_ref,                    # VMEM scratch (PAD + B*S_in, E)
    *,
    num_layers: int,
    batch: int,
    pad_rows: int,
):
    E = inp_w_ref.shape[1]

    # inp_layer (QuantLinear, quantizers treated as identity) on all tokens.
    h = (
        jnp.dot(x_ref[...], inp_w_ref[...], preferred_element_type=jnp.float32)
        + inp_b_ref[...]
    )

    # Assemble [cls rows | zero pad | token rows] via the VMEM scratch
    # (concat-through-memory; every store is at an aligned sublane offset).
    act_ref[...] = jnp.zeros_like(act_ref)
    act_ref[0:batch, :] = jnp.broadcast_to(cls_ref[...], (batch, E))
    act_ref[pad_rows:, :] = h

    v = act_ref[...]                                    # (R, E), R = PAD + B*S_in

    # Transformer layers: out = x + MLP(x). (The self-attention result is
    # discarded by the reference forward, so it is omitted here.)
    for l in range(num_layers):                         # static, unrolled
        t = jnp.maximum(v * bn0_s_ref[l] + bn0_h_ref[l], 0.0)        # BN + ReLU
        t = jnp.dot(t, w2_ref[l], preferred_element_type=jnp.float32)  # linear_2
        t = jnp.maximum(t * bn3_s_ref[l] + bn3_h_ref[l], 0.0)        # BN + ReLU
        t = jnp.dot(t, w5_ref[l], preferred_element_type=jnp.float32)  # linear_5
        v = v + t                                                      # residual

    # Output head on the cls rows only: BN -> Linear -> log_softmax.
    c = v[0:batch, :]                                   # (B, E)
    cn = c * hbn_s_ref[...] + hbn_h_ref[...]
    logits = (
        jnp.dot(cn, out_w_ref[...], preferred_element_type=jnp.float32)
        + out_b_ref[...]
    )
    m = jnp.max(logits, axis=-1, keepdims=True)
    lse = m + jnp.log(jnp.sum(jnp.exp(logits - m), axis=-1, keepdims=True))
    o_ref[...] = logits - lse                           # .squeeze(1) is a no-op


# ---------------------------------------------------------------------------
# Wrapper
# ---------------------------------------------------------------------------
def _fold_bn(bn):
    # eval-mode BatchNorm -> x * scale + shift
    scale = bn["gamma"] * jax.lax.rsqrt(bn["var"] + EPS)
    shift = bn["beta"] - bn["mean"] * scale
    return scale, shift


def constituent_net_forward(x, params):
    B, S_in, D_in = x.shape
    E = params["inp_w"].shape[1]
    NC = params["out_w"].shape[1]
    L = len(params["transformers"])

    # Fold BN params and stack per-layer params (tiny one-time ops, jitted).
    bn0 = [_fold_bn(t["bn0"]) for t in params["transformers"]]
    bn3 = [_fold_bn(t["bn3"]) for t in params["transformers"]]
    bn0_s = jnp.stack([s for s, _ in bn0]);  bn0_h = jnp.stack([h for _, h in bn0])
    bn3_s = jnp.stack([s for s, _ in bn3]);  bn3_h = jnp.stack([h for _, h in bn3])
    w2 = jnp.stack([t["w2"] for t in params["transformers"]])
    w5 = jnp.stack([t["w5"] for t in params["transformers"]])
    hbn_s, hbn_h = _fold_bn(params["out_bn"])

    # Round cls-row block up to a sublane multiple so the token block store is
    # aligned at offset `pad_rows`.
    pad_rows = max(8, ((B + 7) // 8) * 8)
    total_rows = pad_rows + B * S_in

    vmem = lambda: pl.BlockSpec(memory_space=pltpu.MemorySpace.VMEM)
    kernel = functools.partial(
        fused_forward_kernel, num_layers=L, batch=B, pad_rows=pad_rows
    )
    return pl.pallas_call(
        kernel,
        out_shape=jax.ShapeDtypeStruct((B, NC), jnp.float32),
        in_specs=[vmem() for _ in range(14)],
        out_specs=vmem(),
        scratch_shapes=[pltpu.VMEM((total_rows, E), jnp.float32)],
    )(
        x.reshape(B * S_in, D_in),
        params["inp_w"], params["inp_b"],
        params["cls_token"].reshape(1, E),
        bn0_s, bn0_h, w2, bn3_s, bn3_h, w5,
        hbn_s, hbn_h,
        params["out_w"], params["out_b"],
    )


# ---------------------------------------------------------------------------
# Parameters (deterministic, synthetic)
# ---------------------------------------------------------------------------
def init_params(key, in_dim, embed_dim, num_classes, num_transformers):
    keys = iter(jax.random.split(key, 256))

    def nk():
        return next(keys)

    def lin(i, o):  # pre-transposed (in, out)
        return jax.random.normal(nk(), (i, o), jnp.float32) * (1.0 / jnp.sqrt(i))

    def bn(c):
        return dict(
            gamma=jax.random.uniform(nk(), (1, c), jnp.float32, 0.8, 1.2),
            beta=jax.random.normal(nk(), (1, c), jnp.float32) * 0.1,
            mean=jax.random.normal(nk(), (1, c), jnp.float32) * 0.1,
            var=jax.random.uniform(nk(), (1, c), jnp.float32, 0.5, 1.5),
        )

    params = dict(
        inp_w=lin(in_dim, embed_dim),
        inp_b=jax.random.normal(nk(), (1, embed_dim), jnp.float32) * 0.1,
        cls_token=jax.random.normal(nk(), (1, 1, embed_dim), jnp.float32),
        out_bn=bn(embed_dim),
        out_w=lin(embed_dim, num_classes),
        out_b=jax.random.normal(nk(), (1, num_classes), jnp.float32) * 0.1,
        transformers=[],
    )
    # NOTE: self-attention params (norm, q/k/v/out, pre_exp_norm) are not
    # created: the reference TransformerQuantBrevitas.forward discards the
    # attention output (it is overwritten by linear_0(x)), so they cannot
    # affect the result.
    for _ in range(num_transformers):
        params["transformers"].append(dict(
            bn0=bn(embed_dim),
            w2=lin(embed_dim, 2 * embed_dim),
            bn3=bn(2 * embed_dim),
            w5=lin(2 * embed_dim, embed_dim),
        ))
    return params


if __name__ == "__main__":
    # num_particles is hard-coded to 30 in the reference -> input seq_len = 30,
    # which becomes 31 after the cls token is prepended.
    B, S_IN, IN_DIM = 2, 30, 16
    EMBED_DIM, NUM_CLASSES, NUM_TRANSFORMERS = 32, 5, 2

    key = jax.random.PRNGKey(0)
    kx, kp = jax.random.split(key)
    x = jax.random.normal(kx, (B, S_IN, IN_DIM), jnp.float32)
    params = init_params(kp, IN_DIM, EMBED_DIM, NUM_CLASSES, NUM_TRANSFORMERS)

    fwd = jax.jit(constituent_net_forward)
    out = jax.block_until_ready(fwd(x, params))
    assert out.shape == (B, NUM_CLASSES) and out.dtype == jnp.float32
    assert bool(jnp.all(jnp.isfinite(out)))
    print("KERNEL_OK")
</pallas_src>

<mosaic_0001>
module attributes {stable_mosaic.version = 11 : i64} {
  func.func @fused_forward_kernel(%arg0: memref<60x16xf32, #tpu.memory_space<vmem>>, %arg1: memref<16x32xf32, #tpu.memory_space<vmem>>, %arg2: memref<1x32xf32, #tpu.memory_space<vmem>>, %arg3: memref<1x32xf32, #tpu.memory_space<vmem>>, %arg4: memref<2x1x32xf32, #tpu.memory_space<vmem>>, %arg5: memref<2x1x32xf32, #tpu.memory_space<vmem>>, %arg6: memref<2x32x64xf32, #tpu.memory_space<vmem>>, %arg7: memref<2x1x64xf32, #tpu.memory_space<vmem>>, %arg8: memref<2x1x64xf32, #tpu.memory_space<vmem>>, %arg9: memref<2x64x32xf32, #tpu.memory_space<vmem>>, %arg10: memref<1x32xf32, #tpu.memory_space<vmem>>, %arg11: memref<1x32xf32, #tpu.memory_space<vmem>>, %arg12: memref<32x5xf32, #tpu.memory_space<vmem>>, %arg13: memref<1x5xf32, #tpu.memory_space<vmem>>, %arg14: memref<2x5xf32, #tpu.memory_space<vmem>>, %arg15: memref<68x32xf32, #tpu.memory_space<vmem>>) attributes {dimension_semantics = [], scalar_prefetch = 0 : i64, scratch_operands = 1 : i64, tpu.core_type = #tpu.core_type<tc>} {
    %c0 = arith.constant 0 : index
    %c0_0 = arith.constant 0 : index
    %0 = vector.load %arg0[%c0, %c0_0] : memref<60x16xf32, #tpu.memory_space<vmem>>, vector<60x16xf32>
    %c0_1 = arith.constant 0 : index
    %c0_2 = arith.constant 0 : index
    %1 = vector.load %arg1[%c0_1, %c0_2] : memref<16x32xf32, #tpu.memory_space<vmem>>, vector<16x32xf32>
    %cst = arith.constant dense<0.000000e+00> : vector<60x32xf32>
    %2 = tpu.matmul %0, %1, %cst {dimension_numbers = #tpu.dot_dimension_numbers<[1], [0], [0], [1], [0, 0, 1, 1], [], []>} : vector<60x16xf32>, vector<16x32xf32>, vector<60x32xf32> -> vector<60x32xf32>
    %c0_3 = arith.constant 0 : index
    %c0_4 = arith.constant 0 : index
    %3 = vector.load %arg2[%c0_3, %c0_4] : memref<1x32xf32, #tpu.memory_space<vmem>>, vector<1x32xf32>
    %4 = vector.broadcast %3 : vector<1x32xf32> to vector<60x32xf32>
    %5 = arith.addf %2, %4 : vector<60x32xf32>
    %cst_5 = arith.constant 0.000000e+00 : f32
    %6 = vector.broadcast %cst_5 : f32 to vector<68x32xf32>
    %c0_6 = arith.constant 0 : index
    %c0_7 = arith.constant 0 : index
    %7 = vector.load %arg15[%c0_6, %c0_7] : memref<68x32xf32, #tpu.memory_space<vmem>>, vector<68x32xf32>
    tpu.vector_store %arg15[%c0_6, %c0_7], %6 {strides = array<i32>} : memref<68x32xf32, #tpu.memory_space<vmem>>, vector<68x32xf32>,
    %c0_8 = arith.constant 0 : index
    %c0_9 = arith.constant 0 : index
    %8 = vector.load %arg3[%c0_8, %c0_9] : memref<1x32xf32, #tpu.memory_space<vmem>>, vector<1x32xf32>
    %9 = vector.shape_cast %8 : vector<1x32xf32> to vector<1x32xf32>
    %10 = vector.broadcast %9 : vector<1x32xf32> to vector<2x32xf32>
    %c0_10 = arith.constant 0 : index
    %c0_11 = arith.constant 0 : index
    %11 = vector.load %arg15[%c0_10, %c0_11] : memref<68x32xf32, #tpu.memory_space<vmem>>, vector<2x32xf32>
    tpu.vector_store %arg15[%c0_10, %c0_11], %10 {strides = array<i32>} : memref<68x32xf32, #tpu.memory_space<vmem>>, vector<2x32xf32>,
    %c8 = arith.constant 8 : index
    %c0_12 = arith.constant 0 : index
    %12 = vector.load %arg15[%c8, %c0_12] : memref<68x32xf32, #tpu.memory_space<vmem>>, vector<60x32xf32>
    tpu.vector_store %arg15[%c8, %c0_12], %5 {strides = array<i32>} : memref<68x32xf32, #tpu.memory_space<vmem>>, vector<60x32xf32>,
    %c0_13 = arith.constant 0 : index
    %c0_14 = arith.constant 0 : index
    %13 = vector.load %arg15[%c0_13, %c0_14] : memref<68x32xf32, #tpu.memory_space<vmem>>, vector<68x32xf32>
    %c0_15 = arith.constant 0 : index
    %c0_16 = arith.constant 0 : index
    %c0_17 = arith.constant 0 : index
    %14 = vector.load %arg4[%c0_15, %c0_16, %c0_17] : memref<2x1x32xf32, #tpu.memory_space<vmem>>, vector<1x1x32xf32>
    %15 = vector.shape_cast %14 : vector<1x1x32xf32> to vector<1x32xf32>
    %16 = vector.broadcast %15 : vector<1x32xf32> to vector<68x32xf32>
    %17 = arith.mulf %13, %16 : vector<68x32xf32>
    %c0_18 = arith.constant 0 : index
    %c0_19 = arith.constant 0 : index
    %c0_20 = arith.constant 0 : index
    %18 = vector.load %arg5[%c0_18, %c0_19, %c0_20] : memref<2x1x32xf32, #tpu.memory_space<vmem>>, vector<1x1x32xf32>
    %19 = vector.shape_cast %18 : vector<1x1x32xf32> to vector<1x32xf32>
    %20 = vector.broadcast %19 : vector<1x32xf32> to vector<68x32xf32>
    %21 = arith.addf %17, %20 : vector<68x32xf32>
    %cst_21 = arith.constant 0.000000e+00 : f32
    %22 = vector.broadcast %cst_21 : f32 to vector<68x32xf32>
    %23 = arith.maximumf %21, %22 : vector<68x32xf32>
    %c0_22 = arith.constant 0 : index
    %c0_23 = arith.constant 0 : index
    %c0_24 = arith.constant 0 : index
    %24 = vector.load %arg6[%c0_22, %c0_23, %c0_24] : memref<2x32x64xf32, #tpu.memory_space<vmem>>, vector<1x32x64xf32>
    %25 = vector.shape_cast %24 : vector<1x32x64xf32> to vector<32x64xf32>
    %cst_25 = arith.constant dense<0.000000e+00> : vector<68x64xf32>
    %26 = tpu.matmul %23, %25, %cst_25 {dimension_numbers = #tpu.dot_dimension_numbers<[1], [0], [0], [1], [0, 0, 1, 1], [], []>} : vector<68x32xf32>, vector<32x64xf32>, vector<68x64xf32> -> vector<68x64xf32>
    %c0_26 = arith.constant 0 : index
    %c0_27 = arith.constant 0 : index
    %c0_28 = arith.constant 0 : index
    %27 = vector.load %arg7[%c0_26, %c0_27, %c0_28] : memref<2x1x64xf32, #tpu.memory_space<vmem>>, vector<1x1x64xf32>
    %28 = vector.shape_cast %27 : vector<1x1x64xf32> to vector<1x64xf32>
    %29 = vector.broadcast %28 : vector<1x64xf32> to vector<68x64xf32>
    %30 = arith.mulf %26, %29 : vector<68x64xf32>
    %c0_29 = arith.constant 0 : index
    %c0_30 = arith.constant 0 : index
    %c0_31 = arith.constant 0 : index
    %31 = vector.load %arg8[%c0_29, %c0_30, %c0_31] : memref<2x1x64xf32, #tpu.memory_space<vmem>>, vector<1x1x64xf32>
    %32 = vector.shape_cast %31 : vector<1x1x64xf32> to vector<1x64xf32>
    %33 = vector.broadcast %32 : vector<1x64xf32> to vector<68x64xf32>
    %34 = arith.addf %30, %33 : vector<68x64xf32>
    %cst_32 = arith.constant 0.000000e+00 : f32
    %35 = vector.broadcast %cst_32 : f32 to vector<68x64xf32>
    %36 = arith.maximumf %34, %35 : vector<68x64xf32>
    %c0_33 = arith.constant 0 : index
    %c0_34 = arith.constant 0 : index
    %c0_35 = arith.constant 0 : index
    %37 = vector.load %arg9[%c0_33, %c0_34, %c0_35] : memref<2x64x32xf32, #tpu.memory_space<vmem>>, vector<1x64x32xf32>
    %38 = vector.shape_cast %37 : vector<1x64x32xf32> to vector<64x32xf32>
    %cst_36 = arith.constant dense<0.000000e+00> : vector<68x32xf32>
    %39 = tpu.matmul %36, %38, %cst_36 {dimension_numbers = #tpu.dot_dimension_numbers<[1], [0], [0], [1], [0, 0, 1, 1], [], []>} : vector<68x64xf32>, vector<64x32xf32>, vector<68x32xf32> -> vector<68x32xf32>
    %40 = arith.addf %13, %39 : vector<68x32xf32>
    %c1 = arith.constant 1 : index
    %c0_37 = arith.constant 0 : index
    %c0_38 = arith.constant 0 : index
    %41 = vector.load %arg4[%c1, %c0_37, %c0_38] : memref<2x1x32xf32, #tpu.memory_space<vmem>>, vector<1x1x32xf32>
    %42 = vector.shape_cast %41 : vector<1x1x32xf32> to vector<1x32xf32>
    %43 = vector.broadcast %42 : vector<1x32xf32> to vector<68x32xf32>
    %44 = arith.mulf %40, %43 : vector<68x32xf32>
    %c1_39 = arith.constant 1 : index
    %c0_40 = arith.constant 0 : index
    %c0_41 = arith.constant 0 : index
    %45 = vector.load %arg5[%c1_39, %c0_40, %c0_41] : memref<2x1x32xf32, #tpu.memory_space<vmem>>, vector<1x1x32xf32>
    %46 = vector.shape_cast %45 : vector<1x1x32xf32> to vector<1x32xf32>
    %47 = vector.broadcast %46 : vector<1x32xf32> to vector<68x32xf32>
    %48 = arith.addf %44, %47 : vector<68x32xf32>
    %cst_42 = arith.constant 0.000000e+00 : f32
    %49 = vector.broadcast %cst_42 : f32 to vector<68x32xf32>
    %50 = arith.maximumf %48, %49 : vector<68x32xf32>
    %c1_43 = arith.constant 1 : index
    %c0_44 = arith.constant 0 : index
    %c0_45 = arith.constant 0 : index
    %51 = vector.load %arg6[%c1_43, %c0_44, %c0_45] : memref<2x32x64xf32, #tpu.memory_space<vmem>>, vector<1x32x64xf32>
    %52 = vector.shape_cast %51 : vector<1x32x64xf32> to vector<32x64xf32>
    %cst_46 = arith.constant dense<0.000000e+00> : vector<68x64xf32>
    %53 = tpu.matmul %50, %52, %cst_46 {dimension_numbers = #tpu.dot_dimension_numbers<[1], [0], [0], [1], [0, 0, 1, 1], [], []>} : vector<68x32xf32>, vector<32x64xf32>, vector<68x64xf32> -> vector<68x64xf32>
    %c1_47 = arith.constant 1 : index
    %c0_48 = arith.constant 0 : index
    %c0_49 = arith.constant 0 : index
    %54 = vector.load %arg7[%c1_47, %c0_48, %c0_49] : memref<2x1x64xf32, #tpu.memory_space<vmem>>, vector<1x1x64xf32>
    %55 = vector.shape_cast %54 : vector<1x1x64xf32> to vector<1x64xf32>
    %56 = vector.broadcast %55 : vector<1x64xf32> to vector<68x64xf32>
    %57 = arith.mulf %53, %56 : vector<68x64xf32>
    %c1_50 = arith.constant 1 : index
    %c0_51 = arith.constant 0 : index
    %c0_52 = arith.constant 0 : index
    %58 = vector.load %arg8[%c1_50, %c0_51, %c0_52] : memref<2x1x64xf32, #tpu.memory_space<vmem>>, vector<1x1x64xf32>
    %59 = vector.shape_cast %58 : vector<1x1x64xf32> to vector<1x64xf32>
    %60 = vector.broadcast %59 : vector<1x64xf32> to vector<68x64xf32>
    %61 = arith.addf %57, %60 : vector<68x64xf32>
    %cst_53 = arith.constant 0.000000e+00 : f32
    %62 = vector.broadcast %cst_53 : f32 to vector<68x64xf32>
    %63 = arith.maximumf %61, %62 : vector<68x64xf32>
    %c1_54 = arith.constant 1 : index
    %c0_55 = arith.constant 0 : index
    %c0_56 = arith.constant 0 : index
    %64 = vector.load %arg9[%c1_54, %c0_55, %c0_56] : memref<2x64x32xf32, #tpu.memory_space<vmem>>, vector<1x64x32xf32>
    %65 = vector.shape_cast %64 : vector<1x64x32xf32> to vector<64x32xf32>
    %cst_57 = arith.constant dense<0.000000e+00> : vector<68x32xf32>
    %66 = tpu.matmul %63, %65, %cst_57 {dimension_numbers = #tpu.dot_dimension_numbers<[1], [0], [0], [1], [0, 0, 1, 1], [], []>} : vector<68x64xf32>, vector<64x32xf32>, vector<68x32xf32> -> vector<68x32xf32>
    %67 = arith.addf %40, %66 : vector<68x32xf32>
    %68 = vector.extract_strided_slice %67 {offsets = [0, 0], sizes = [2, 32], strides = [1, 1]} : vector<68x32xf32> to vector<2x32xf32>
    %c0_58 = arith.constant 0 : index
    %c0_59 = arith.constant 0 : index
    %69 = vector.load %arg10[%c0_58, %c0_59] : memref<1x32xf32, #tpu.memory_space<vmem>>, vector<1x32xf32>
    %70 = vector.broadcast %69 : vector<1x32xf32> to vector<2x32xf32>
    %71 = arith.mulf %68, %70 : vector<2x32xf32>
    %c0_60 = arith.constant 0 : index
    %c0_61 = arith.constant 0 : index
    %72 = vector.load %arg11[%c0_60, %c0_61] : memref<1x32xf32, #tpu.memory_space<vmem>>, vector<1x32xf32>
    %73 = vector.broadcast %72 : vector<1x32xf32> to vector<2x32xf32>
    %74 = arith.addf %71, %73 : vector<2x32xf32>
    %c0_62 = arith.constant 0 : index
    %c0_63 = arith.constant 0 : index
    %75 = vector.load %arg12[%c0_62, %c0_63] : memref<32x5xf32, #tpu.memory_space<vmem>>, vector<32x5xf32>
    %cst_64 = arith.constant dense<0.000000e+00> : vector<2x5xf32>
    %76 = tpu.matmul %74, %75, %cst_64 {dimension_numbers = #tpu.dot_dimension_numbers<[1], [0], [0], [1], [0, 0, 1, 1], [], []>} : vector<2x32xf32>, vector<32x5xf32>, vector<2x5xf32> -> vector<2x5xf32>
    %c0_65 = arith.constant 0 : index
    %c0_66 = arith.constant 0 : index
    %77 = vector.load %arg13[%c0_65, %c0_66] : memref<1x5xf32, #tpu.memory_space<vmem>>, vector<1x5xf32>
    %78 = vector.broadcast %77 : vector<1x5xf32> to vector<2x5xf32>
    %79 = arith.addf %76, %78 : vector<2x5xf32>
    %cst_67 = arith.constant dense<0xFF800000> : vector<2xf32>
    %80 = vector.multi_reduction <maximumf>, %79, %cst_67 [1] : vector<2x5xf32> to vector<2xf32>
    %81 = vector.shape_cast %80 : vector<2xf32> to vector<2x1xf32>
    %82 = vector.broadcast %81 : vector<2x1xf32> to vector<2x5xf32>
    %83 = arith.subf %79, %82 : vector<2x5xf32>
    %84 = math.exp %83 : vector<2x5xf32>
    %cst_68 = arith.constant dense<0.000000e+00> : vector<2xf32>
    %85 = vector.multi_reduction <add>, %84, %cst_68 [1] : vector<2x5xf32> to vector<2xf32>
    %86 = vector.shape_cast %85 : vector<2xf32> to vector<2x1xf32>
    %87 = math.log %86 : vector<2x1xf32>
    %88 = arith.addf %81, %87 : vector<2x1xf32>
    %89 = vector.broadcast %88 : vector<2x1xf32> to vector<2x5xf32>
    %90 = arith.subf %79, %89 : vector<2x5xf32>
    %c0_69 = arith.constant 0 : index
    %c0_70 = arith.constant 0 : index
    %91 = vector.load %arg14[%c0_69, %c0_70] : memref<2x5xf32, #tpu.memory_space<vmem>>, vector<2x5xf32>
    tpu.vector_store %arg14[%c0_69, %c0_70], %90 {strides = array<i32>} : memref<2x5xf32, #tpu.memory_space<vmem>>, vector<2x5xf32>,
    return
  }
}

</mosaic_0001>

<llo_original>
// kernel: constituent_net_forward.1
$region0: #{constituent_net_forward.1}
  #allocation0 [shape = 'u32[]', space=smem, size = 0x4, offset = 0x4, fixed_abs, tag = 'smem constant byte address 0x4 - core index']
  #allocation1 [shape = 'u32[72,128]{1,0:T(1,128)}', space=vmem, size = 0x9000, scoped, tag = 'internal scratch']
  #allocation2 [shape = 'f32[68,32]{1,0:T(8,128)}', space=vmem, size = 0x9000, scoped, tag = 'scratch operand']
  %s0 = inlined_call_operand.vmem [shape: f32[60,16], index: 0, kind: input, shape index: {}]
  %s1 = inlined_call_operand.vmem [shape: f32[16,32], index: 1, kind: input, shape index: {}]
  %s2 = inlined_call_operand.vmem [shape: f32[1,32], index: 2, kind: input, shape index: {}]
  %s3 = inlined_call_operand.vmem [shape: f32[1,32], index: 3, kind: input, shape index: {}]
  %s4 = inlined_call_operand.vmem [shape: f32[2,1,32], index: 4, kind: input, shape index: {}]
  %s5 = inlined_call_operand.vmem [shape: f32[2,1,32], index: 5, kind: input, shape index: {}]
  %s6 = inlined_call_operand.vmem [shape: f32[2,32,64], index: 6, kind: input, shape index: {}]
  %s7 = inlined_call_operand.vmem [shape: f32[2,1,64], index: 7, kind: input, shape index: {}]
  %s8 = inlined_call_operand.vmem [shape: f32[2,1,64], index: 8, kind: input, shape index: {}]
  %s9 = inlined_call_operand.vmem [shape: f32[2,64,32], index: 9, kind: input, shape index: {}]
  %s10 = inlined_call_operand.vmem [shape: f32[1,32], index: 10, kind: input, shape index: {}]
  %s11 = inlined_call_operand.vmem [shape: f32[1,32], index: 11, kind: input, shape index: {}]
  %s12 = inlined_call_operand.vmem [shape: f32[32,5], index: 12, kind: input, shape index: {}]
  %s13 = inlined_call_operand.vmem [shape: f32[1,5], index: 13, kind: input, shape index: {}]
  %s14 = inlined_call_operand.hbm [shape: f32[2,5], index: 14, kind: output, shape index: {}]
  %s15 = sld [smem:[#allocation0]]
  $region66: #{constituent_net_forward.1} parent=0
    _
  %s17 = ssub.s32 1, %s15
  %s18 = scalar_select 0, %s17, %s15
  $region1: #{constituent_net_forward.1} parent=0
    #allocation3 [shape = 'u8[1024]{0}', space=vmem, size = 0x400, scoped, tag = 'output window, operand 0, single buffered']
    #allocation4 [shape = 's32[1]{0}', space=sflag, size = 0x4, scoped, tag = 'scoped memory for constituent_net_forward.1']
    %19 = vsyncpa [#allocation4], 0
    // Predicated region
    $region2: #{constituent_net_forward.1} parent=1 // pred_check
      _
    $region3: #{constituent_net_forward.1} parent=1 // pred_check_branch
      %21 = sbr.rel (0) target = $region5
    $region4: #{constituent_net_forward.1} parent=1 // pred_region
      _
    $region5: #{constituent_net_forward.1} parent=1 // pred_fallthru
      _
    // Predicated region
    $region6: #{constituent_net_forward.1} parent=1 // pred_check
      _
    $region7: #{constituent_net_forward.1} parent=1 // pred_check_branch
      %23 = sbr.rel (0) target = $region9
    $region8: #{constituent_net_forward.1} parent=1 // pred_region
      _
    $region9: #{constituent_net_forward.1} parent=1 // pred_fallthru
      _
    // Predicated region
    $region10: #{constituent_net_forward.1} parent=1 // pred_check
      _
    $region11: #{constituent_net_forward.1} parent=1 // pred_check_branch
      %25 = sbr.rel (0) target = $region13
    $region12: #{constituent_net_forward.1} parent=1 // pred_region
      _
    $region13: #{constituent_net_forward.1} parent=1 // pred_fallthru
      _
    // Predicated region
    $region14: #{constituent_net_forward.1} parent=1 // pred_check
      _
    $region15: #{constituent_net_forward.1} parent=1 // pred_check_branch
      %27 = sbr.rel (0) target = $region17
    $region16: #{constituent_net_forward.1} parent=1 // pred_region
      _
    $region17: #{constituent_net_forward.1} parent=1 // pred_fallthru
      _
    // Predicated region
    $region18: #{constituent_net_forward.1} parent=1 // pred_check
      _
    $region19: #{constituent_net_forward.1} parent=1 // pred_check_branch
      %29 = sbr.rel (0) target = $region21
    $region20: #{constituent_net_forward.1} parent=1 // pred_region
      _
    $region21: #{constituent_net_forward.1} parent=1 // pred_fallthru
      _
    // Predicated region
    $region22: #{constituent_net_forward.1} parent=1 // pred_check
      _
    $region23: #{constituent_net_forward.1} parent=1 // pred_check_branch
      %31 = sbr.rel (0) target = $region25
    $region24: #{constituent_net_forward.1} parent=1 // pred_region
      _
    $region25: #{constituent_net_forward.1} parent=1 // pred_fallthru
      _
    // Predicated region
    $region26: #{constituent_net_forward.1} parent=1 // pred_check
      _
    $region27: #{constituent_net_forward.1} parent=1 // pred_check_branch
      %33 = sbr.rel (0) target = $region29
    $region28: #{constituent_net_forward.1} parent=1 // pred_region
      _
    $region29: #{constituent_net_forward.1} parent=1 // pred_fallthru
      _
    // Predicated region
    $region30: #{constituent_net_forward.1} parent=1 // pred_check
      _
    $region31: #{constituent_net_forward.1} parent=1 // pred_check_branch
      %35 = sbr.rel (0) target = $region33
    $region32: #{constituent_net_forward.1} parent=1 // pred_region
      _
    $region33: #{constituent_net_forward.1} parent=1 // pred_fallthru
      _
    // Predicated region
    $region34: #{constituent_net_forward.1} parent=1 // pred_check
      _
    $region35: #{constituent_net_forward.1} parent=1 // pred_check_branch
      %37 = sbr.rel (0) target = $region37
    $region36: #{constituent_net_forward.1} parent=1 // pred_region
      _
    $region37: #{constituent_net_forward.1} parent=1 // pred_fallthru
      _
    // Predicated region
    $region38: #{constituent_net_forward.1} parent=1 // pred_check
      _
    $region39: #{constituent_net_forward.1} parent=1 // pred_check_branch
      %39 = sbr.rel (0) target = $region41
    $region40: #{constituent_net_forward.1} parent=1 // pred_region
      _
    $region41: #{constituent_net_forward.1} parent=1 // pred_fallthru
      _
    // Predicated region
    $region42: #{constituent_net_forward.1} parent=1 // pred_check
      _
    $region43: #{constituent_net_forward.1} parent=1 // pred_check_branch
      %41 = sbr.rel (0) target = $region45
    $region44: #{constituent_net_forward.1} parent=1 // pred_region
      _
    $region45: #{constituent_net_forward.1} parent=1 // pred_fallthru
      _
    // Predicated region
    $region46: #{constituent_net_forward.1} parent=1 // pred_check
      _
    $region47: #{constituent_net_forward.1} parent=1 // pred_check_branch
      %43 = sbr.rel (0) target = $region49
    $region48: #{constituent_net_forward.1} parent=1 // pred_region
      _
    $region49: #{constituent_net_forward.1} parent=1 // pred_fallthru
      _
    // Predicated region
    $region50: #{constituent_net_forward.1} parent=1 // pred_check
      _
    $region51: #{constituent_net_forward.1} parent=1 // pred_check_branch
      %45 = sbr.rel (0) target = $region53
    $region52: #{constituent_net_forward.1} parent=1 // pred_region
      _
    $region53: #{constituent_net_forward.1} parent=1 // pred_fallthru
      _
    // Predicated region
    $region54: #{constituent_net_forward.1} parent=1 // pred_check
      _
    $region55: #{constituent_net_forward.1} parent=1 // pred_check_branch
      %47 = sbr.rel (0) target = $region57
    $region56: #{constituent_net_forward.1} parent=1 // pred_region
      _
    $region57: #{constituent_net_forward.1} parent=1 // pred_fallthru
      _
    %v48 = vld [vmem:[%s0] sm:$0xff]
    %v49 = vld [vmem:[%s0 + $0x8] sm:$0xff]
    %v50 = vld [vmem:[%s0 + $0x10] sm:$0xff]
    %v51 = vld [vmem:[%s0 + $0x18] sm:$0xff]
    %v52 = vld [vmem:[%s0 + $0x20] sm:$0xff]
    %v53 = vld [vmem:[%s0 + $0x28] sm:$0xff]
    %v54 = vld [vmem:[%s0 + $0x30] sm:$0xff]
    %v55 = vld [vmem:[%s0 + $0x38] sm:$0xf]
    %v56 = vld [vmem:[%s1] sm:$0xff]
    %v57 = vld [vmem:[%s1 + $0x8] sm:$0xff]
    %v58 = vld [vmem:[%s2] sm:$0x1]
    %v60 = vperm.slane %v58, 0
    %vm62 = vcmask 130048
    %v64 = vsel %vm62, %v48, 0
    %v67 = vsel %vm62, %v49, 0
    %v70 = vsel %vm62, %v50, 0
    %v73 = vsel %vm62, %v51, 0
    %v76 = vsel %vm62, %v52, 0
    %v79 = vsel %vm62, %v53, 0
    %v82 = vsel %vm62, %v54, 0
    %v85 = vsel %vm62, %v55, 0
    %87 = vmatpush.msra.mxu0 0.0
    %88 = vmatpush.msra.mxu0 0.0
    %89 = vmatpush.msra.mxu0 0.0
    %90 = vmatpush.msra.mxu0 0.0
    %91 = vmatpush.msra.mxu0 0.0
    %92 = vmatpush.msra.mxu0 0.0
    %93 = vmatpush.msra.mxu0 0.0
    %94 = vmatpush.msra.mxu0 0.0
    %95 = vmatpush.msra.mxu0 0.0
    %96 = vmatpush.msra.mxu0 0.0
    %97 = vmatpush.msra.mxu0 0.0
    %98 = vmatpush.msra.mxu0 0.0
    %99 = vmatpush.msra.mxu0 0.0
    %100 = vmatpush.msra.mxu0 0.0
    %101 = vmatpush.msra.mxu0 %v57
    %102 = vmatpush.msra.mxu0 %v56
    %103 = vmatmul.f32.gmra.mxu0 %v64
    %v104 = vpop.f32.mrf.mxu0
    %v105 = vadd.f32 %v60, %v104
    %106 = vmatmul.f32.gmra.mxu0 %v67
    %v107 = vpop.f32.mrf.mxu0
    %v108 = vadd.f32 %v60, %v107
    %109 = vmatmul.f32.gmra.mxu0 %v70
    %v110 = vpop.f32.mrf.mxu0
    %v111 = vadd.f32 %v60, %v110
    %112 = vmatmul.f32.gmra.mxu0 %v73
    %v113 = vpop.f32.mrf.mxu0
    %v114 = vadd.f32 %v60, %v113
    %115 = vmatmul.f32.gmra.mxu0 %v76
    %v116 = vpop.f32.mrf.mxu0
    %v117 = vadd.f32 %v60, %v116
    %118 = vmatmul.f32.gmra.mxu0 %v79
    %v119 = vpop.f32.mrf.mxu0
    %v120 = vadd.f32 %v60, %v119
    %121 = vmatmul.f32.gmra.mxu0 %v82
    %v122 = vpop.f32.mrf.mxu0
    %v123 = vadd.f32 %v60, %v122
    %124 = vmatmul.f32.gmra.mxu0 %v85
    %v125 = vpop.f32.mrf.mxu0
    %v126 = vadd.f32 %v60, %v125
    %127 = vdwg.mxu0
    %vm128 = vcmask 261120
    %129 = vst.msk [vmem:[#allocation2] sm:$0xff] %vm128, 0.0
    %130 = vst.msk [vmem:[#allocation2 + $0x8] sm:$0xff] %vm128, 0.0
    %131 = vst.msk [vmem:[#allocation2 + $0x10] sm:$0xff] %vm128, 0.0
    %132 = vst.msk [vmem:[#allocation2 + $0x18] sm:$0xff] %vm128, 0.0
    %133 = vst.msk [vmem:[#allocation2 + $0x20] sm:$0xff] %vm128, 0.0
    %134 = vst.msk [vmem:[#allocation2 + $0x28] sm:$0xff] %vm128, 0.0
    %135 = vst.msk [vmem:[#allocation2 + $0x30] sm:$0xff] %vm128, 0.0
    %136 = vst.msk [vmem:[#allocation2 + $0x38] sm:$0xff] %vm128, 0.0
    %vm137 = vcmask 257024
    %138 = vst.msk [vmem:[#allocation2 + $0x40] sm:$0xf] %vm137, 0.0
    %v139 = vld [vmem:[%s3] sm:$0x1]
    %v141 = vperm.slane %v139, 0
    %vm143 = vcmask 254976
    %144 = vst.msk [vmem:[#allocation2] sm:$0x3] %vm143, %v141
    %145 = vst.msk [vmem:[#allocation2 + $0x8] sm:$0xff] %vm128, %v105
    %146 = vst.msk [vmem:[#allocation2 + $0x10] sm:$0xff] %vm128, %v108
    %147 = vst.msk [vmem:[#allocation2 + $0x18] sm:$0xff] %vm128, %v111
    %148 = vst.msk [vmem:[#allocation2 + $0x20] sm:$0xff] %vm128, %v114
    %149 = vst.msk [vmem:[#allocation2 + $0x28] sm:$0xff] %vm128, %v117
    %150 = vst.msk [vmem:[#allocation2 + $0x30] sm:$0xff] %vm128, %v120
    %151 = vst.msk [vmem:[#allocation2 + $0x38] sm:$0xff] %vm128, %v123
    %152 = vst.msk [vmem:[#allocation2 + $0x40] sm:$0xf] %vm137, %v126
    %v153 = vld [vmem:[#allocation2] sm:$0xff]
    %v154 = vld [vmem:[#allocation2 + $0x8] sm:$0xff]
    %v155 = vld [vmem:[#allocation2 + $0x10] sm:$0xff]
    %v156 = vld [vmem:[#allocation2 + $0x18] sm:$0xff]
    %v157 = vld [vmem:[#allocation2 + $0x20] sm:$0xff]
    %v158 = vld [vmem:[#allocation2 + $0x28] sm:$0xff]
    %v159 = vld [vmem:[#allocation2 + $0x30] sm:$0xff]
    %v160 = vld [vmem:[#allocation2 + $0x38] sm:$0xff]
    %v161 = vld [vmem:[#allocation2 + $0x40] sm:$0xf]
    %v162 = vld [vmem:[%s4] sm:$0x1]
    %v164 = vperm.slane %v162, 0
    %v166 = vmul.f32 %v153, %v164
    %v167 = vmul.f32 %v154, %v164
    %v168 = vmul.f32 %v155, %v164
    %v169 = vmul.f32 %v156, %v164
    %v170 = vmul.f32 %v157, %v164
    %v171 = vmul.f32 %v158, %v164
    %v172 = vmul.f32 %v159, %v164
    %v173 = vmul.f32 %v160, %v164
    %v174 = vmul.f32 %v161, %v164
    %v175 = vld [vmem:[%s5] sm:$0x1]
    %v177 = vperm.slane %v175, 0
    %v179 = vadd.f32 %v166, %v177
    %v180 = vadd.f32 %v167, %v177
    %v181 = vadd.f32 %v168, %v177
    %v182 = vadd.f32 %v169, %v177
    %v183 = vadd.f32 %v170, %v177
    %v184 = vadd.f32 %v171, %v177
    %v185 = vadd.f32 %v172, %v177
    %v186 = vadd.f32 %v173, %v177
    %v187 = vadd.f32 %v174, %v177
    %v188 = vmax.f32 %v179, 0.0
    %v189 = vmax.f32 %v180, 0.0
    %v190 = vmax.f32 %v181, 0.0
    %v191 = vmax.f32 %v182, 0.0
    %v192 = vmax.f32 %v183, 0.0
    %v193 = vmax.f32 %v184, 0.0
    %v194 = vmax.f32 %v185, 0.0
    %v195 = vmax.f32 %v186, 0.0
    %v196 = vmax.f32 %v187, 0.0
    %v197 = vld [vmem:[%s6] sm:$0xff]
    %v198 = vld [vmem:[%s6 + $0x8] sm:$0xff]
    %v199 = vld [vmem:[%s6 + $0x10] sm:$0xff]
    %v200 = vld [vmem:[%s6 + $0x18] sm:$0xff]
    %v202 = vsel %vm128, %v188, 0
    %v205 = vsel %vm128, %v189, 0
    %v208 = vsel %vm128, %v190, 0
    %v211 = vsel %vm128, %v191, 0
    %v214 = vsel %vm128, %v192, 0
    %v217 = vsel %vm128, %v193, 0
    %v220 = vsel %vm128, %v194, 0
    %v223 = vsel %vm128, %v195, 0
    %v226 = vsel %vm128, %v196, 0
    %228 = vmatpush.msra.mxu0 0.0
    %229 = vmatpush.msra.mxu0 0.0
    %230 = vmatpush.msra.mxu0 0.0
    %231 = vmatpush.msra.mxu0 0.0
    %232 = vmatpush.msra.mxu0 0.0
    %233 = vmatpush.msra.mxu0 0.0
    %234 = vmatpush.msra.mxu0 0.0
    %235 = vmatpush.msra.mxu0 0.0
    %236 = vmatpush.msra.mxu0 0.0
    %237 = vmatpush.msra.mxu0 0.0
    %238 = vmatpush.msra.mxu0 0.0
    %239 = vmatpush.msra.mxu0 0.0
    %240 = vmatpush.msra.mxu0 %v200
    %241 = vmatpush.msra.mxu0 %v199
    %242 = vmatpush.msra.mxu0 %v198
    %243 = vmatpush.msra.mxu0 %v197
    %244 = vmatmul.f32.gmra.mxu0 %v202
    %v245 = vpop.f32.mrf.mxu0
    %v246 = vadd.f32 0.0, %v245
    %247 = vmatmul.f32.gmra.mxu0 %v205
    %v248 = vpop.f32.mrf.mxu0
    %v249 = vadd.f32 0.0, %v248
    %250 = vmatmul.f32.gmra.mxu0 %v208
    %v251 = vpop.f32.mrf.mxu0
    %v252 = vadd.f32 0.0, %v251
    %253 = vmatmul.f32.gmra.mxu0 %v211
    %v254 = vpop.f32.mrf.mxu0
    %v255 = vadd.f32 0.0, %v254
    %256 = vmatmul.f32.gmra.mxu0 %v214
    %v257 = vpop.f32.mrf.mxu0
    %v258 = vadd.f32 0.0, %v257
    %259 = vmatmul.f32.gmra.mxu0 %v217
    %v260 = vpop.f32.mrf.mxu0
    %v261 = vadd.f32 0.0, %v260
    %262 = vmatmul.f32.gmra.mxu0 %v220
    %v263 = vpop.f32.mrf.mxu0
    %v264 = vadd.f32 0.0, %v263
    %265 = vmatmul.f32.gmra.mxu0 %v223
    %v266 = vpop.f32.mrf.mxu0
    %v267 = vadd.f32 0.0, %v266
    %268 = vmatmul.f32.gmra.mxu0 %v226
    %v269 = vpop.f32.mrf.mxu0
    %v270 = vadd.f32 0.0, %v269
    %271 = vdwg.mxu0
    %v272 = vld [vmem:[%s7] sm:$0x1]
    %v274 = vperm.slane %v272, 0
    %v276 = vmul.f32 %v246, %v274
    %v277 = vmul.f32 %v249, %v274
    %v278 = vmul.f32 %v252, %v274
    %v279 = vmul.f32 %v255, %v274
    %v280 = vmul.f32 %v258, %v274
    %v281 = vmul.f32 %v261, %v274
    %v282 = vmul.f32 %v264, %v274
    %v283 = vmul.f32 %v267, %v274
    %v284 = vmul.f32 %v270, %v274
    %v285 = vld [vmem:[%s8] sm:$0x1]
    %v287 = vperm.slane %v285, 0
    %v289 = vadd.f32 %v276, %v287
    %v290 = vadd.f32 %v277, %v287
    %v291 = vadd.f32 %v278, %v287
    %v292 = vadd.f32 %v279, %v287
    %v293 = vadd.f32 %v280, %v287
    %v294 = vadd.f32 %v281, %v287
    %v295 = vadd.f32 %v282, %v287
    %v296 = vadd.f32 %v283, %v287
    %v297 = vadd.f32 %v284, %v287
    %v298 = vmax.f32 %v289, 0.0
    %v299 = vmax.f32 %v290, 0.0
    %v300 = vmax.f32 %v291, 0.0
    %v301 = vmax.f32 %v292, 0.0
    %v302 = vmax.f32 %v293, 0.0
    %v303 = vmax.f32 %v294, 0.0
    %v304 = vmax.f32 %v295, 0.0
    %v305 = vmax.f32 %v296, 0.0
    %v306 = vmax.f32 %v297, 0.0
    %v307 = vld [vmem:[%s9] sm:$0xff]
    %v308 = vld [vmem:[%s9 + $0x8] sm:$0xff]
    %v309 = vld [vmem:[%s9 + $0x10] sm:$0xff]
    %v310 = vld [vmem:[%s9 + $0x18] sm:$0xff]
    %v311 = vld [vmem:[%s9 + $0x20] sm:$0xff]
    %v312 = vld [vmem:[%s9 + $0x28] sm:$0xff]
    %v313 = vld [vmem:[%s9 + $0x30] sm:$0xff]
    %v314 = vld [vmem:[%s9 + $0x38] sm:$0xff]
    %vm315 = vcmask 523264
    %v317 = vsel %vm315, %v298, 0
    %v320 = vsel %vm315, %v299, 0
    %v323 = vsel %vm315, %v300, 0
    %v326 = vsel %vm315, %v301, 0
    %v329 = vsel %vm315, %v302, 0
    %v332 = vsel %vm315, %v303, 0
    %v335 = vsel %vm315, %v304, 0
    %v338 = vsel %vm315, %v305, 0
    %v341 = vsel %vm315, %v306, 0
    %343 = vmatpush.msra.mxu0 0.0
    %344 = vmatpush.msra.mxu0 0.0
    %345 = vmatpush.msra.mxu0 0.0
    %346 = vmatpush.msra.mxu0 0.0
    %347 = vmatpush.msra.mxu0 0.0
    %348 = vmatpush.msra.mxu0 0.0
    %349 = vmatpush.msra.mxu0 0.0
    %350 = vmatpush.msra.mxu0 0.0
    %351 = vmatpush.msra.mxu0 %v314
    %352 = vmatpush.msra.mxu0 %v313
    %353 = vmatpush.msra.mxu0 %v312
    %354 = vmatpush.msra.mxu0 %v311
    %355 = vmatpush.msra.mxu0 %v310
    %356 = vmatpush.msra.mxu0 %v309
    %357 = vmatpush.msra.mxu0 %v308
    %358 = vmatpush.msra.mxu0 %v307
    %359 = vmatmul.f32.gmra.mxu0 %v317
    %v360 = vpop.f32.mrf.mxu0
    %v361 = vadd.f32 0.0, %v360
    %362 = vmatmul.f32.gmra.mxu0 %v320
    %v363 = vpop.f32.mrf.mxu0
    %v364 = vadd.f32 0.0, %v363
    %365 = vmatmul.f32.gmra.mxu0 %v323
    %v366 = vpop.f32.mrf.mxu0
    %v367 = vadd.f32 0.0, %v366
    %368 = vmatmul.f32.gmra.mxu0 %v326
    %v369 = vpop.f32.mrf.mxu0
    %v370 = vadd.f32 0.0, %v369
    %371 = vmatmul.f32.gmra.mxu0 %v329
    %v372 = vpop.f32.mrf.mxu0
    %v373 = vadd.f32 0.0, %v372
    %374 = vmatmul.f32.gmra.mxu0 %v332
    %v375 = vpop.f32.mrf.mxu0
    %v376 = vadd.f32 0.0, %v375
    %377 = vmatmul.f32.gmra.mxu0 %v335
    %v378 = vpop.f32.mrf.mxu0
    %v379 = vadd.f32 0.0, %v378
    %380 = vmatmul.f32.gmra.mxu0 %v338
    %v381 = vpop.f32.mrf.mxu0
    %v382 = vadd.f32 0.0, %v381
    %383 = vmatmul.f32.gmra.mxu0 %v341
    %v384 = vpop.f32.mrf.mxu0
    %v385 = vadd.f32 0.0, %v384
    %386 = vdwg.mxu0
    %v387 = vadd.f32 %v153, %v361
    %v388 = vadd.f32 %v154, %v364
    %v389 = vadd.f32 %v155, %v367
    %v390 = vadd.f32 %v156, %v370
    %v391 = vadd.f32 %v157, %v373
    %v392 = vadd.f32 %v158, %v376
    %v393 = vadd.f32 %v159, %v379
    %v394 = vadd.f32 %v160, %v382
    %v395 = vadd.f32 %v161, %v385
    %s396 = scalar_lea.vmem %s4, 1
    %v397 = vld [vmem:[%s396] sm:$0x1]
    %v399 = vperm.slane %v397, 0
    %v401 = vmul.f32 %v387, %v399
    %v402 = vmul.f32 %v388, %v399
    %v403 = vmul.f32 %v389, %v399
    %v404 = vmul.f32 %v390, %v399
    %v405 = vmul.f32 %v391, %v399
    %v406 = vmul.f32 %v392, %v399
    %v407 = vmul.f32 %v393, %v399
    %v408 = vmul.f32 %v394, %v399
    %v409 = vmul.f32 %v395, %v399
    %s410 = scalar_lea.vmem %s5, 1
    %v411 = vld [vmem:[%s410] sm:$0x1]
    %v413 = vperm.slane %v411, 0
    %v415 = vadd.f32 %v401, %v413
    %v416 = vadd.f32 %v402, %v413
    %v417 = vadd.f32 %v403, %v413
    %v418 = vadd.f32 %v404, %v413
    %v419 = vadd.f32 %v405, %v413
    %v420 = vadd.f32 %v406, %v413
    %v421 = vadd.f32 %v407, %v413
    %v422 = vadd.f32 %v408, %v413
    %v423 = vadd.f32 %v409, %v413
    %v424 = vmax.f32 %v415, 0.0
    %v425 = vmax.f32 %v416, 0.0
    %v426 = vmax.f32 %v417, 0.0
    %v427 = vmax.f32 %v418, 0.0
    %v428 = vmax.f32 %v419, 0.0
    %v429 = vmax.f32 %v420, 0.0
    %v430 = vmax.f32 %v421, 0.0
    %v431 = vmax.f32 %v422, 0.0
    %v432 = vmax.f32 %v423, 0.0
    %s433 = scalar_lea.vmem %s6, 32
    %v434 = vld [vmem:[%s433] sm:$0xff]
    %v435 = vld [vmem:[%s433 + $0x8] sm:$0xff]
    %v436 = vld [vmem:[%s433 + $0x10] sm:$0xff]
    %v437 = vld [vmem:[%s433 + $0x18] sm:$0xff]
    %v439 = vsel %vm128, %v424, 0
    %v442 = vsel %vm128, %v425, 0
    %v445 = vsel %vm128, %v426, 0
    %v448 = vsel %vm128, %v427, 0
    %v451 = vsel %vm128, %v428, 0
    %v454 = vsel %vm128, %v429, 0
    %v457 = vsel %vm128, %v430, 0
    %v460 = vsel %vm128, %v431, 0
    %v463 = vsel %vm128, %v432, 0
    %465 = vmatpush.msra.mxu0 0.0
    %466 = vmatpush.msra.mxu0 0.0
    %467 = vmatpush.msra.mxu0 0.0
    %468 = vmatpush.msra.mxu0 0.0
    %469 = vmatpush.msra.mxu0 0.0
    %470 = vmatpush.msra.mxu0 0.0
    %471 = vmatpush.msra.mxu0 0.0
    %472 = vmatpush.msra.mxu0 0.0
    %473 = vmatpush.msra.mxu0 0.0
    %474 = vmatpush.msra.mxu0 0.0
    %475 = vmatpush.msra.mxu0 0.0
    %476 = vmatpush.msra.mxu0 0.0
    %477 = vmatpush.msra.mxu0 %v437
    %478 = vmatpush.msra.mxu0 %v436
    %479 = vmatpush.msra.mxu0 %v435
    %480 = vmatpush.msra.mxu0 %v434
    %481 = vmatmul.f32.gmra.mxu0 %v439
    %v482 = vpop.f32.mrf.mxu0
    %v483 = vadd.f32 0.0, %v482
    %484 = vmatmul.f32.gmra.mxu0 %v442
    %v485 = vpop.f32.mrf.mxu0
    %v486 = vadd.f32 0.0, %v485
    %487 = vmatmul.f32.gmra.mxu0 %v445
    %v488 = vpop.f32.mrf.mxu0
    %v489 = vadd.f32 0.0, %v488
    %490 = vmatmul.f32.gmra.mxu0 %v448
    %v491 = vpop.f32.mrf.mxu0
    %v492 = vadd.f32 0.0, %v491
    %493 = vmatmul.f32.gmra.mxu0 %v451
    %v494 = vpop.f32.mrf.mxu0
    %v495 = vadd.f32 0.0, %v494
    %496 = vmatmul.f32.gmra.mxu0 %v454
    %v497 = vpop.f32.mrf.mxu0
    %v498 = vadd.f32 0.0, %v497
    %499 = vmatmul.f32.gmra.mxu0 %v457
    %v500 = vpop.f32.mrf.mxu0
    %v501 = vadd.f32 0.0, %v500
    %502 = vmatmul.f32.gmra.mxu0 %v460
    %v503 = vpop.f32.mrf.mxu0
    %v504 = vadd.f32 0.0, %v503
    %505 = vmatmul.f32.gmra.mxu0 %v463
    %v506 = vpop.f32.mrf.mxu0
    %v507 = vadd.f32 0.0, %v506
    %508 = vdwg.mxu0
    %s509 = scalar_lea.vmem %s7, 1
    %v510 = vld [vmem:[%s509] sm:$0x1]
    %v512 = vperm.slane %v510, 0
    %v514 = vmul.f32 %v483, %v512
    %v515 = vmul.f32 %v486, %v512
    %v516 = vmul.f32 %v489, %v512
    %v517 = vmul.f32 %v492, %v512
    %v518 = vmul.f32 %v495, %v512
    %v519 = vmul.f32 %v498, %v512
    %v520 = vmul.f32 %v501, %v512
    %v521 = vmul.f32 %v504, %v512
    %v522 = vmul.f32 %v507, %v512
    %s523 = scalar_lea.vmem %s8, 1
    %v524 = vld [vmem:[%s523] sm:$0x1]
    %v526 = vperm.slane %v524, 0
    %v528 = vadd.f32 %v514, %v526
    %v529 = vadd.f32 %v515, %v526
    %v530 = vadd.f32 %v516, %v526
    %v531 = vadd.f32 %v517, %v526
    %v532 = vadd.f32 %v518, %v526
    %v533 = vadd.f32 %v519, %v526
    %v534 = vadd.f32 %v520, %v526
    %v535 = vadd.f32 %v521, %v526
    %v536 = vadd.f32 %v522, %v526
    %v537 = vmax.f32 %v528, 0.0
    %v538 = vmax.f32 %v529, 0.0
    %v539 = vmax.f32 %v530, 0.0
    %v540 = vmax.f32 %v531, 0.0
    %v541 = vmax.f32 %v532, 0.0
    %v542 = vmax.f32 %v533, 0.0
    %v543 = vmax.f32 %v534, 0.0
    %v544 = vmax.f32 %v535, 0.0
    %v545 = vmax.f32 %v536, 0.0
    %s546 = scalar_lea.vmem %s9, 64
    %v547 = vld [vmem:[%s546] sm:$0xff]
    %v548 = vld [vmem:[%s546 + $0x8] sm:$0xff]
    %v549 = vld [vmem:[%s546 + $0x10] sm:$0xff]
    %v550 = vld [vmem:[%s546 + $0x18] sm:$0xff]
    %v551 = vld [vmem:[%s546 + $0x20] sm:$0xff]
    %v552 = vld [vmem:[%s546 + $0x28] sm:$0xff]
    %v553 = vld [vmem:[%s546 + $0x30] sm:$0xff]
    %v554 = vld [vmem:[%s546 + $0x38] sm:$0xff]
    %v556 = vsel %vm315, %v537, 0
    %v559 = vsel %vm315, %v538, 0
    %v562 = vsel %vm315, %v539, 0
    %v565 = vsel %vm315, %v540, 0
    %v568 = vsel %vm315, %v541, 0
    %v571 = vsel %vm315, %v542, 0
    %v574 = vsel %vm315, %v543, 0
    %v577 = vsel %vm315, %v544, 0
    %v580 = vsel %vm315, %v545, 0
    %582 = vmatpush.msra.mxu0 0.0
    %583 = vmatpush.msra.mxu0 0.0
    %584 = vmatpush.msra.mxu0 0.0
    %585 = vmatpush.msra.mxu0 0.0
    %586 = vmatpush.msra.mxu0 0.0
    %587 = vmatpush.msra.mxu0 0.0
    %588 = vmatpush.msra.mxu0 0.0
    %589 = vmatpush.msra.mxu0 0.0
    %590 = vmatpush.msra.mxu0 %v554
    %591 = vmatpush.msra.mxu0 %v553
    %592 = vmatpush.msra.mxu0 %v552
    %593 = vmatpush.msra.mxu0 %v551
    %594 = vmatpush.msra.mxu0 %v550
    %595 = vmatpush.msra.mxu0 %v549
    %596 = vmatpush.msra.mxu0 %v548
    %597 = vmatpush.msra.mxu0 %v547
    %598 = vmatmul.f32.gmra.mxu0 %v556
    %v599 = vpop.f32.mrf.mxu0
    %v600 = vadd.f32 0.0, %v599
    %601 = vmatmul.f32.gmra.mxu0 %v559
    %v602 = vpop.f32.mrf.mxu0
    %603 = vmatmul.f32.gmra.mxu0 %v562
    %v604 = vpop.f32.mrf.mxu0
    %605 = vmatmul.f32.gmra.mxu0 %v565
    %v606 = vpop.f32.mrf.mxu0
    %607 = vmatmul.f32.gmra.mxu0 %v568
    %v608 = vpop.f32.mrf.mxu0
    %609 = vmatmul.f32.gmra.mxu0 %v571
    %v610 = vpop.f32.mrf.mxu0
    %611 = vmatmul.f32.gmra.mxu0 %v574
    %v612 = vpop.f32.mrf.mxu0
    %613 = vmatmul.f32.gmra.mxu0 %v577
    %v614 = vpop.f32.mrf.mxu0
    %615 = vmatmul.f32.gmra.mxu0 %v580
    %v616 = vpop.f32.mrf.mxu0
    %617 = vdwg.mxu0
    %v618 = vadd.f32 %v387, %v600
    %v619 = vld [vmem:[%s10] sm:$0x1]
    %v621 = vperm.slane %v619, 0
    %v623 = vmul.f32 %v618, %v621
    %v624 = vld [vmem:[%s11] sm:$0x1]
    %v626 = vperm.slane %v624, 0
    %v628 = vadd.f32 %v623, %v626
    %v629 = vld [vmem:[%s12] sm:$0xff]
    %v630 = vld [vmem:[%s12 + $0x8] sm:$0xff]
    %v631 = vld [vmem:[%s12 + $0x10] sm:$0xff]
    %v632 = vld [vmem:[%s12 + $0x18] sm:$0xff]
    %v633 = vld [vmem:[%s13] sm:$0x1]
    %v635 = vperm.slane %v633, 0
    %v638 = vsel %vm128, %v628, 0
    %640 = vmatpush.msra.mxu0 0.0
    %641 = vmatpush.msra.mxu0 0.0
    %642 = vmatpush.msra.mxu0 0.0
    %643 = vmatpush.msra.mxu0 0.0
    %644 = vmatpush.msra.mxu0 0.0
    %645 = vmatpush.msra.mxu0 0.0
    %646 = vmatpush.msra.mxu0 0.0
    %647 = vmatpush.msra.mxu0 0.0
    %648 = vmatpush.msra.mxu0 0.0
    %649 = vmatpush.msra.mxu0 0.0
    %650 = vmatpush.msra.mxu0 0.0
    %651 = vmatpush.msra.mxu0 0.0
    %652 = vmatpush.msra.mxu0 %v632
    %653 = vmatpush.msra.mxu0 %v631
    %654 = vmatpush.msra.mxu0 %v630
    %655 = vmatpush.msra.mxu0 %v629
    %656 = vmatmul.f32.gmra.mxu0 %v638
    %v657 = vpop.f32.mrf.mxu0
    %v658 = vadd.f32 %v635, %v657
    %659 = vdwg.mxu0
    %vm660 = vcmask 33792
    %v661 = vsel %vm660, %v658, -inf
    %662 = vmax.xlane.f32.xlu0 %v661
    %v663 = vpop.xlane.xlu0 %662
    %v664 = vsub.f32 %v658, %v663
    %v665 = vmul.f32 %v664, 1.442695
    %v666 = vpow.pop %v665
    %v667 = vsel %vm660, %v666, 0.0
    %668 = vadd.xlane.f32.xlu0 %v667
    %v669 = vpop.xlane.xlu0 %668
    %v670 = vlog2.pop %v669
    %v671 = vmul.f32 %v670, 0.6931472
    %v672 = vadd.f32 %v663, %v671
    %v673 = vsub.f32 %v658, %v672
    %674 = vst.msk [vmem:[#allocation3] sm:$0x3] %vm660, %v673
    // Predicated region
    $region58: #{constituent_net_forward.1} parent=1 // pred_check
      _
    $region59: #{constituent_net_forward.1} parent=1 // pred_check_branch
      %676 = sbr.rel (0) target = $region61
    $region60: #{constituent_net_forward.1} parent=1 // pred_region
      %678 = vsyncadd [#allocation4], 0
      %s680 = sshll.u32 [#allocation3], 4
      %s681 = int_to_ptr.vmem [resolvable:$true] %s680
      %s682 = sshll.u32 %s14, 4
      %s683 = int_to_ptr.hbm [resolvable:$true] %s682
      %685 = dma.vmem_to_hbm [thread:$0]  %s681, 32, %s683, [#allocation4]
    $region61: #{constituent_net_forward.1} parent=1 // pred_fallthru
      _
    // Predicated region
    $region62: #{constituent_net_forward.1} parent=1 // pred_check
      _
    $region63: #{constituent_net_forward.1} parent=1 // pred_check_branch
      %687 = sbr.rel (0) target = $region65
    $region64: #{constituent_net_forward.1} parent=1 // pred_region
      %689 = dma.done [#allocation4], 32
    $region65: #{constituent_net_forward.1} parent=1 // pred_fallthru
      _
    %690 = vsyncpa [#allocation4], 1

</llo_original>
